<compile_context>
chip_gen: v5e
topology: v5e:2x2
jax: 0.10.0
libtpu: 0.0.40
codegen_flags: <defaults>
</compile_context>

<pallas_src>
import numpy as np
import jax
import jax.numpy as jnp
from jax.experimental import pallas as pl
from jax.experimental.pallas import tpu as pltpu

NEG_SLOPE = 0.2


def _round_up(x, m):
    return ((x + m - 1) // m) * m


# --------------------------------------------------------------------------
# Kernel 1: linear projection + attention scores (per dst-node tile)
# --------------------------------------------------------------------------
def proj_kernel(feat_ref, w_ref, attn_ref, wh_ref, el_ref, ert_ref):
    # (TM, Din) bf16 @ (Din, H*F) bf16 -> f32 on the MXU
    wh = jnp.dot(feat_ref[...], w_ref[...], preferred_element_type=jnp.float32)
    # one tiny f32 matmul gives el (cols :H) and er (cols H:) for all heads
    scores = jnp.dot(wh, attn_ref[...], preferred_element_type=jnp.float32)
    H = el_ref.shape[1]
    wh_ref[...] = wh.astype(wh_ref.dtype)      # bf16 for the SpMM later
    el_ref[...] = scores[:, :H]                # (TM, H)  dst term
    ert_ref[...] = scores[:, H:].T             # (H, TM)  src term, pre-transposed


# --------------------------------------------------------------------------
# Kernel 2: masked edge-softmax + SpMM with online softmax across src tiles
# --------------------------------------------------------------------------
def gat_agg_kernel(el_ref, ert_ref, wh_ref, adj_ref, out_ref, m_sc, l_sc, acc_sc):
    j = pl.program_id(1)
    TM, H = m_sc.shape
    HF = acc_sc.shape[1]
    F = HF // H

    @pl.when(j == 0)
    def _init():
        m_sc[...] = jnp.full_like(m_sc, -1e30)
        l_sc[...] = jnp.zeros_like(l_sc)
        acc_sc[...] = jnp.zeros_like(acc_sc)

    adj = adj_ref[...].astype(jnp.float32)     # (TM, TK) 0/1 mask, shared by heads
    el = el_ref[...]                           # (TM, H) f32
    ert = ert_ref[...]                         # (H, TK) f32
    wh_src = wh_ref[...]                       # (TK, H*F) bf16
    m_prev = m_sc[...]                         # (TM, H)
    l_prev = l_sc[...]                         # (TM, H)

    m_cols, l_cols, corr_cols, part_cols = [], [], [], []
    for h in range(H):                         # H is small & static -> unrolled
        # edge (src j -> dst i): score = er[j] + el[i]    (dgl.ops.u_add_v)
        s = el[:, h:h + 1] + ert[h:h + 1, :]                    # (TM, TK)
        s = jnp.where(s > 0, s, NEG_SLOPE * s)                  # LeakyReLU
        m_h = jnp.maximum(m_prev[:, h:h + 1],
                          jnp.max(s, axis=-1, keepdims=True))   # running max
        p = jnp.exp(s - m_h) * adj             # single masking op (non-edges -> 0)
        corr = jnp.exp(m_prev[:, h:h + 1] - m_h)
        l_h = corr * l_prev[:, h:h + 1] + jnp.sum(p, axis=-1, keepdims=True)
        # unnormalized aggregation on the MXU, bf16 in / f32 acc
        part = jnp.dot(p.astype(jnp.bfloat16), wh_src[:, h * F:(h + 1) * F],
                       preferred_element_type=jnp.float32)      # (TM, F)
        m_cols.append(m_h)
        l_cols.append(l_h)
        corr_cols.append(jnp.broadcast_to(corr, (TM, F)))
        part_cols.append(part)

    # consolidated, lane-dense scratch updates (one store each)
    m_sc[...] = jnp.concatenate(m_cols, axis=1)
    l_sc[...] = jnp.concatenate(l_cols, axis=1)
    acc_sc[...] = acc_sc[...] * jnp.concatenate(corr_cols, axis=1) \
        + jnp.concatenate(part_cols, axis=1)

    @pl.when(j == pl.num_programs(1) - 1)
    def _finalize():
        l = l_sc[...]
        # zero in-degree rows: acc == 0, guard keeps them at exactly 0
        inv = pl.reciprocal(jnp.where(l > 0, l, 1.0), approx=True)   # (TM, H) EUP
        inv_full = jnp.concatenate(
            [jnp.broadcast_to(inv[:, h:h + 1], (TM, F)) for h in range(H)], axis=1)
        out_ref[...] = (acc_sc[...] * inv_full).astype(out_ref.dtype)


# --------------------------------------------------------------------------
# Wrapper mirroring GATConv_no_fusion.forward
# --------------------------------------------------------------------------
def _pick_tiles(n, tm, tk):
    if tm is not None and tk is not None:
        return tm, tk
    try:
        vmem = pltpu.get_tpu_info().vmem_capacity_bytes
    except Exception:
        vmem = 64 << 20
    # v7x: 64 MiB VMEM -> halve the src tile vs v5e/v6e (128 MiB).
    tk_target = 512 if vmem >= (100 << 20) else 256
    n128 = _round_up(max(n, 1), 128)
    if n128 <= 128:
        auto_tm, auto_tk = 128, 128
    elif n128 <= 256:
        auto_tm, auto_tk = 256, 256
    else:
        auto_tm, auto_tk = 256, tk_target
    return (tm or auto_tm), (tk or auto_tk)


def gat_forward(row_ptr, col_ind, col_ptr, row_ind, feat, permute,
                fc_weight_t, attn_l, attn_r, *, tm=None, tk=None):
    """feat: (N, Din); fc_weight_t: (Din, H*F) (fc.weight pre-transposed);
    attn_l/attn_r: (H, F); CSR row_ptr/col_ind with row = dst, col = src.
    Returns (N, H, F)."""
    N, Din = feat.shape
    H, F = attn_l.shape
    HF = H * F

    tm, tk = _pick_tiles(N, tm, tk)
    n_pad = _round_up(_round_up(N, tk), tm)

    # ---- glue: pad & cast inputs -------------------------------------------
    feat_bf = jnp.zeros((n_pad, Din), jnp.bfloat16).at[:N].set(
        feat.astype(jnp.bfloat16))
    w_bf = fc_weight_t.astype(jnp.bfloat16)                       # (Din, HF)

    # block-diagonal attention matrix: (wh @ A)[:, h] = el_h, [:, H+h] = er_h
    eye = jnp.eye(H, dtype=jnp.float32)
    m_l = (attn_l.astype(jnp.float32)[:, :, None] * eye[:, None, :]).reshape(HF, H)
    m_r = (attn_r.astype(jnp.float32)[:, :, None] * eye[:, None, :]).reshape(HF, H)
    attn_mat = jnp.concatenate([m_l, m_r], axis=1)                # (HF, 2H) f32

    # dense 0/1 adjacency mask in bf16 (row = dst, col = src); padded region = 0
    E = col_ind.shape[0]
    deg = row_ptr[1:] - row_ptr[:-1]
    row_of_edge = jnp.repeat(jnp.arange(N, dtype=jnp.int32), deg,
                             total_repeat_length=E)
    adj = jnp.zeros((n_pad, n_pad), jnp.float32).at[
        row_of_edge, col_ind].set(1.0).astype(jnp.bfloat16)

    # ---- kernel 1: projection + attention scores ---------------------------
    wh, el, er_t = pl.pallas_call(
        proj_kernel,
        grid=(n_pad // tm,),
        in_specs=[
            pl.BlockSpec((tm, Din), lambda i: (i, 0)),
            pl.BlockSpec((Din, HF), lambda i: (0, 0)),
            pl.BlockSpec((HF, 2 * H), lambda i: (0, 0)),
        ],
        out_specs=[
            pl.BlockSpec((tm, HF), lambda i: (i, 0)),
            pl.BlockSpec((tm, H), lambda i: (i, 0)),
            pl.BlockSpec((H, tm), lambda i: (0, i)),
        ],
        out_shape=[
            jax.ShapeDtypeStruct((n_pad, HF), jnp.bfloat16),
            jax.ShapeDtypeStruct((n_pad, H), jnp.float32),
            jax.ShapeDtypeStruct((H, n_pad), jnp.float32),
        ],
        compiler_params=pltpu.CompilerParams(
            dimension_semantics=("parallel",)),
    )(feat_bf, w_bf, attn_mat)

    # ---- kernel 2: masked online-softmax aggregation ------------------------
    out = pl.pallas_call(
        gat_agg_kernel,
        grid=(n_pad // tm, n_pad // tk),
        in_specs=[
            pl.BlockSpec((tm, H), lambda i, j: (i, 0)),    # el (dst tile)
            pl.BlockSpec((H, tk), lambda i, j: (0, j)),    # er^T (src tile)
            pl.BlockSpec((tk, HF), lambda i, j: (j, 0)),   # wh_src (src tile)
            pl.BlockSpec((tm, tk), lambda i, j: (i, j)),   # adjacency tile
        ],
        out_specs=pl.BlockSpec((tm, HF), lambda i, j: (i, 0)),
        out_shape=jax.ShapeDtypeStruct((n_pad, HF), jnp.float32),
        scratch_shapes=[
            pltpu.VMEM((tm, H), jnp.float32),    # running max
            pltpu.VMEM((tm, H), jnp.float32),    # running denom
            pltpu.VMEM((tm, HF), jnp.float32),   # accumulator
        ],
        compiler_params=pltpu.CompilerParams(
            dimension_semantics=("parallel", "arbitrary")),
    )(el, er_t, wh, adj)

    return out[:N].reshape(N, H, F)


# --------------------------------------------------------------------------
# Reference + test
# --------------------------------------------------------------------------
def _reference(feat, W_t, attn_l, attn_r, adj):
    feat, W_t, attn_l, attn_r, adj = map(np.asarray, (feat, W_t, attn_l, attn_r, adj))
    N = feat.shape[0]
    H, F = attn_l.shape
    wh = (feat @ W_t).reshape(N, H, F)
    el = (wh * attn_l[None]).sum(-1)            # (N, H) dst term
    er = (wh * attn_r[None]).sum(-1)            # (N, H) src term
    s = el[:, None, :] + er[None, :, :]         # (Ndst, Nsrc, H)
    s = np.where(s > 0, s, NEG_SLOPE * s)
    mask = adj[:, :, None]
    s = np.where(mask > 0, s, -1e30)
    m = s.max(axis=1, keepdims=True)
    p = np.exp(s - m) * mask
    denom = p.sum(axis=1, keepdims=True)
    denom = np.where(denom > 0, denom, 1.0)
    alpha = p / denom
    return np.einsum("ijh,jhf->ihf", alpha, wh)


def _bf16_round(x):
    return np.asarray(jnp.asarray(x, jnp.float32).astype(jnp.bfloat16),
                      dtype=np.float32)


if __name__ == "__main__":
    N, Din, F_out, H = 300, 16, 8, 4

    key = jax.random.PRNGKey(0)
    k_w, k_al, k_ar, k_feat, k_adj = jax.random.split(key, 5)

    gain = float(np.sqrt(2.0))
    std_w = gain * np.sqrt(2.0 / (Din + H * F_out))
    std_a = gain * np.sqrt(2.0 / (H * F_out + F_out))
    # pre-round bf16-cast tensors so the bf16 MXU path is exactly representable
    fc_weight_t = _bf16_round(
        jax.random.normal(k_w, (Din, H * F_out), jnp.float32) * std_w)
    attn_l = np.asarray(jax.random.normal(k_al, (H, F_out), jnp.float32) * std_a)
    attn_r = np.asarray(jax.random.normal(k_ar, (H, F_out), jnp.float32) * std_a)
    feat = _bf16_round(jax.random.normal(k_feat, (N, Din), jnp.float32))

    # Deterministic random graph; CSR with row = destination node; self loops.
    adj_np = np.array(jax.random.uniform(k_adj, (N, N)) < 0.03, dtype=np.float32)
    np.fill_diagonal(adj_np, 1.0)
    row_ptr_np = np.zeros(N + 1, np.int32)
    cols = []
    for i in range(N):
        nz = np.nonzero(adj_np[i])[0].astype(np.int32)
        cols.append(nz)
        row_ptr_np[i + 1] = row_ptr_np[i] + len(nz)
    col_ind_np = np.concatenate(cols).astype(np.int32)
    E = col_ind_np.shape[0]

    # CSC + permutation placeholders (unused by the dense-mask kernel path).
    col_ptr_np = np.zeros(N + 1, np.int32)
    row_ind_np = np.zeros(E, np.int32)
    permute_np = np.arange(E, dtype=np.int32)

    rst = gat_forward(jnp.asarray(row_ptr_np), jnp.asarray(col_ind_np),
                      jnp.asarray(col_ptr_np), jnp.asarray(row_ind_np),
                      jnp.asarray(feat), jnp.asarray(permute_np),
                      jnp.asarray(fc_weight_t), jnp.asarray(attn_l),
                      jnp.asarray(attn_r),
                      tm=128, tk=128)  # small tiles so the test exercises a
                                       # multi-tile (3, 3) grid on every chip
    rst = jax.block_until_ready(rst)

    ref = _reference(feat, fc_weight_t, attn_l, attn_r, adj_np)
    np.testing.assert_allclose(np.asarray(rst), ref, rtol=2e-2, atol=2e-2)

    print("KERNEL_OK")
</pallas_src>

<mosaic_0001>
module attributes {stable_mosaic.version = 11 : i64} {
  func.func @proj_kernel(%arg0: i32, %arg1: memref<128x16xbf16, #tpu.memory_space<vmem>>, %arg2: memref<16x32xbf16, #tpu.memory_space<vmem>>, %arg3: memref<32x8xf32, #tpu.memory_space<vmem>>, %arg4: memref<128x32xbf16, #tpu.memory_space<vmem>>, %arg5: memref<128x4xf32, #tpu.memory_space<vmem>>, %arg6: memref<4x128xf32, #tpu.memory_space<vmem>>) attributes {dimension_semantics = [#tpu.dimension_semantics<parallel>], iteration_bounds = array<i64: 3>, scalar_prefetch = 0 : i64, scratch_operands = 0 : i64, tpu.core_type = #tpu.core_type<tc>, window_params = [{transform_indices = @transform_0, window_bounds = array<i64: 128, 16>}, {pipeline_mode = #tpu.pipeline_mode<synchronous>, transform_indices = @transform_1, window_bounds = array<i64: 16, 32>}, {pipeline_mode = #tpu.pipeline_mode<synchronous>, transform_indices = @transform_2, window_bounds = array<i64: 32, 8>}, {transform_indices = @transform_3, window_bounds = array<i64: 128, 32>}, {transform_indices = @transform_4, window_bounds = array<i64: 128, 4>}, {transform_indices = @transform_5, window_bounds = array<i64: 4, 128>}]} {
    %c0 = arith.constant 0 : index
    %c0_0 = arith.constant 0 : index
    %0 = vector.load %arg1[%c0, %c0_0] : memref<128x16xbf16, #tpu.memory_space<vmem>>, vector<128x16xbf16>
    %c0_1 = arith.constant 0 : index
    %c0_2 = arith.constant 0 : index
    %1 = vector.load %arg2[%c0_1, %c0_2] : memref<16x32xbf16, #tpu.memory_space<vmem>>, vector<16x32xbf16>
    %cst = arith.constant dense<0.000000e+00> : vector<128x32xf32>
    %2 = tpu.matmul %0, %1, %cst {dimension_numbers = #tpu.dot_dimension_numbers<[1], [0], [0], [1], [0, 0, 1, 1], [], []>} : vector<128x16xbf16>, vector<16x32xbf16>, vector<128x32xf32> -> vector<128x32xf32>
    %c0_3 = arith.constant 0 : index
    %c0_4 = arith.constant 0 : index
    %3 = vector.load %arg3[%c0_3, %c0_4] : memref<32x8xf32, #tpu.memory_space<vmem>>, vector<32x8xf32>
    %cst_5 = arith.constant dense<0.000000e+00> : vector<128x8xf32>
    %4 = tpu.matmul %2, %3, %cst_5 {dimension_numbers = #tpu.dot_dimension_numbers<[1], [0], [0], [1], [0, 0, 1, 1], [], []>} : vector<128x32xf32>, vector<32x8xf32>, vector<128x8xf32> -> vector<128x8xf32>
    %5 = arith.truncf %2 : vector<128x32xf32> to vector<128x32xbf16>
    %c0_6 = arith.constant 0 : index
    %c0_7 = arith.constant 0 : index
    %6 = vector.load %arg4[%c0_6, %c0_7] : memref<128x32xbf16, #tpu.memory_space<vmem>>, vector<128x32xbf16>
    tpu.vector_store %arg4[%c0_6, %c0_7], %5 {strides = array<i32>} : memref<128x32xbf16, #tpu.memory_space<vmem>>, vector<128x32xbf16>,
    %7 = vector.extract_strided_slice %4 {offsets = [0, 0], sizes = [128, 4], strides = [1, 1]} : vector<128x8xf32> to vector<128x4xf32>
    %c0_8 = arith.constant 0 : index
    %c0_9 = arith.constant 0 : index
    %8 = vector.load %arg5[%c0_8, %c0_9] : memref<128x4xf32, #tpu.memory_space<vmem>>, vector<128x4xf32>
    tpu.vector_store %arg5[%c0_8, %c0_9], %7 {strides = array<i32>} : memref<128x4xf32, #tpu.memory_space<vmem>>, vector<128x4xf32>,
    %9 = vector.extract_strided_slice %4 {offsets = [0, 4], sizes = [128, 4], strides = [1, 1]} : vector<128x8xf32> to vector<128x4xf32>
    %10 = tpu.transpose %9, [1, 0] : vector<128x4xf32> -> vector<4x128xf32>
    %c0_10 = arith.constant 0 : index
    %c0_11 = arith.constant 0 : index
    %11 = vector.load %arg6[%c0_10, %c0_11] : memref<4x128xf32, #tpu.memory_space<vmem>>, vector<4x128xf32>
    tpu.vector_store %arg6[%c0_10, %c0_11], %10 {strides = array<i32>} : memref<4x128xf32, #tpu.memory_space<vmem>>, vector<4x128xf32>,
    return
  }
  func.func @transform_0(%arg0: i32) -> (i32, i32) {
    %c0_i32 = arith.constant 0 : i32
    %c0_i32_0 = arith.constant 0 : i32
    return %arg0, %c0_i32 : i32, i32
  }
  func.func @transform_1(%arg0: i32) -> (i32, i32) {
    %c0_i32 = arith.constant 0 : i32
    %c0_i32_0 = arith.constant 0 : i32
    %c0_i32_1 = arith.constant 0 : i32
    return %c0_i32, %c0_i32_0 : i32, i32
  }
  func.func @transform_2(%arg0: i32) -> (i32, i32) {
    %c0_i32 = arith.constant 0 : i32
    %c0_i32_0 = arith.constant 0 : i32
    %c0_i32_1 = arith.constant 0 : i32
    return %c0_i32, %c0_i32_0 : i32, i32
  }
  func.func @transform_3(%arg0: i32) -> (i32, i32) {
    %c0_i32 = arith.constant 0 : i32
    %c0_i32_0 = arith.constant 0 : i32
    return %arg0, %c0_i32 : i32, i32
  }
  func.func @transform_4(%arg0: i32) -> (i32, i32) {
    %c0_i32 = arith.constant 0 : i32
    %c0_i32_0 = arith.constant 0 : i32
    return %arg0, %c0_i32 : i32, i32
  }
  func.func @transform_5(%arg0: i32) -> (i32, i32) {
    %c0_i32 = arith.constant 0 : i32
    %c0_i32_0 = arith.constant 0 : i32
    return %c0_i32, %arg0 : i32, i32
  }
}

</mosaic_0001>

<llo_original>
// kernel: tpu_custom_call.1
$region0: #{tpu_custom_call.1}
  #allocation0 [shape = 'u32[]', space=smem, size = 0x4, offset = 0x4, fixed_abs, tag = 'smem constant byte address 0x4 - core index']
  #allocation1 [shape = 'u32[72,128]{1,0:T(1,128)}', space=vmem, size = 0x9000, scoped, tag = 'internal scratch']
  %s0 = inlined_call_operand.vmem [shape: bf16[384,16], index: 0, kind: input, shape index: {}]
  %s1 = inlined_call_operand.vmem [shape: bf16[16,32], index: 1, kind: input, shape index: {}]
  %s2 = inlined_call_operand.vmem [shape: f32[32,8], index: 2, kind: input, shape index: {}]
  %s3 = inlined_call_operand.vmem [shape: bf16[384,32], index: 3, kind: output, shape index: {0}]
  %s4 = inlined_call_operand.vmem [shape: f32[384,4], index: 4, kind: output, shape index: {1}]
  %s5 = inlined_call_operand.hbm [shape: f32[4,384], index: 5, kind: output, shape index: {2}]
  %6 = xla_tuple %s3, %s4, %s5
  %s7 = sld [smem:[#allocation0]]
  $region61: #{tpu_custom_call.1} parent=0
    _
  %s9 = ssub.s32 1, %s7
  %s10 = scalar_select 0, %s9, %s7
  $region1: #{tpu_custom_call.1} parent=0
    #allocation2 [shape = 'u8[4096]{0}', space=vmem, size = 0x1000, scoped, tag = 'output window, operand 2']
    #allocation3 [shape = 's32[2]{0}', space=sflag, size = 0x8, scoped, tag = 'scoped memory for tpu_custom_call.1']
    %11 = vsyncpa [#allocation3], 0
    %s12 = scalar_lea.sflag [#allocation3], 1
    %13 = vsyncpa %s12, 0
    loop: start=0, step=1, limit=5
    $region2: #{tpu_custom_call.1} parent=1 // loop_pre_header
      _
    $region3: #{tpu_custom_call.1} parent=1 // loop_header
      %s15 = sphi 0, %s19
      %p16 = scmp.ge.s32.totalorder %s15, 5
      %s25 = sphi 0, %s27
      %s28 = sphi 0, %s25
      %s29 = sphi 0, %s28
      %s45 = sphi 0, %s29
      %s49 = sphi 0, %s49
      %s51 = sphi 0, %s49
      %s52 = sphi 0, %s51
      %s66 = sphi 0, %s52
      %s70 = sphi 0, %s70
      %s72 = sphi 0, %s70
      %s73 = sphi 0, %s72
      %s87 = sphi 0, %s73
      %s93 = sphi 0, %s95
      %s96 = sphi 0, %s93
      %s97 = sphi 0, %s96
      %s113 = sphi 0, %s97
      %s119 = sphi 0, %s121
      %s122 = sphi 0, %s119
      %s123 = sphi 0, %s122
      %s139 = sphi 0, %s123
      %s145 = sphi 0, %s147
      %s148 = sphi 0, %s145
      %s149 = sphi 0, %s148
      %s165 = sphi 0, %s149
    $region4: #{tpu_custom_call.1} parent=1 // loop_header_branch
      %18 = sbr.rel (%p16) target = $region8
    $region5: #{tpu_custom_call.1} parent=1 // loop_body
      %s20 = ssub.s32 %s15, 1
      %s21 = ssub.s32 %s15, 2
      %s22 = sadd.s32 %s15, 1
      %s23 = ssub.s32 %s15, %s22
      %p24 = scmp.eq.s32.totalorder %s23, 0
      %s26 = sadd.s32 %s25, 1
      %s27 = scalar_select %p24, %s25, %s26
      %p30 = pneg %p24
      %p31 = scmp.eq.s32.totalorder %s15, 2
      %p32 = por %p30, %p31
      %p33 = scmp.ne.s32.totalorder %s25, %s28
      %p34 = scmp.eq.s32.totalorder %s15, 0
      %p35 = por %p33, %p34
      %p36 = scmp.ne.s32.totalorder %s25, %s28
      %p37 = scmp.eq.s32.totalorder %s20, 2
      %p38 = por %p36, %p37
      %p39 = scmp.ne.s32.totalorder %s28, %s29
      %p40 = scmp.eq.s32.totalorder %s20, 0
      %p41 = por %p39, %p40
      %p42 = scmp.ne.s32.totalorder %s28, %s29
      %p43 = scmp.eq.s32.totalorder %s21, 2
      %p44 = por %p42, %p43
      %p46 = scmp.ne.s32.totalorder %s29, %s45
      %p47 = scmp.eq.s32.totalorder %s21, 0
      %p48 = por %p46, %p47
      %s50 = sadd.s32 %s49, 1
      %p53 = scmp.eq.s32.totalorder %s15, 2
      %p54 = scmp.ne.s32.totalorder %s49, %s51
      %p55 = scmp.eq.s32.totalorder %s15, 0
      %p56 = por %p54, %p55
      %p57 = scmp.ne.s32.totalorder %s49, %s51
      %p58 = scmp.eq.s32.totalorder %s20, 2
      %p59 = por %p57, %p58
      %p60 = scmp.ne.s32.totalorder %s51, %s52
      %p61 = scmp.eq.s32.totalorder %s20, 0
      %p62 = por %p60, %p61
      %p63 = scmp.ne.s32.totalorder %s51, %s52
      %p64 = scmp.eq.s32.totalorder %s21, 2
      %p65 = por %p63, %p64
      %p67 = scmp.ne.s32.totalorder %s52, %s66
      %p68 = scmp.eq.s32.totalorder %s21, 0
      %p69 = por %p67, %p68
      %s71 = sadd.s32 %s70, 1
      %p74 = scmp.eq.s32.totalorder %s15, 2
      %p75 = scmp.ne.s32.totalorder %s70, %s72
      %p76 = scmp.eq.s32.totalorder %s15, 0
      %p77 = por %p75, %p76
      %p78 = scmp.ne.s32.totalorder %s70, %s72
      %p79 = scmp.eq.s32.totalorder %s20, 2
      %p80 = por %p78, %p79
      %p81 = scmp.ne.s32.totalorder %s72, %s73
      %p82 = scmp.eq.s32.totalorder %s20, 0
      %p83 = por %p81, %p82
      %p84 = scmp.ne.s32.totalorder %s72, %s73
      %p85 = scmp.eq.s32.totalorder %s21, 2
      %p86 = por %p84, %p85
      %p88 = scmp.ne.s32.totalorder %s73, %s87
      %p89 = scmp.eq.s32.totalorder %s21, 0
      %p90 = por %p88, %p89
      %s91 = ssub.s32 %s15, %s22
      %p92 = scmp.eq.s32.totalorder %s91, 0
      %s94 = sadd.s32 %s93, 1
      %s95 = scalar_select %p92, %s93, %s94
      %p98 = pneg %p92
      %p99 = scmp.eq.s32.totalorder %s15, 2
      %p100 = por %p98, %p99
      %p101 = scmp.ne.s32.totalorder %s93, %s96
      %p102 = scmp.eq.s32.totalorder %s15, 0
      %p103 = por %p101, %p102
      %p104 = scmp.ne.s32.totalorder %s93, %s96
      %p105 = scmp.eq.s32.totalorder %s20, 2
      %p106 = por %p104, %p105
      %p107 = scmp.ne.s32.totalorder %s96, %s97
      %p108 = scmp.eq.s32.totalorder %s20, 0
      %p109 = por %p107, %p108
      %p110 = scmp.ne.s32.totalorder %s96, %s97
      %p111 = scmp.eq.s32.totalorder %s21, 2
      %p112 = por %p110, %p111
      %p114 = scmp.ne.s32.totalorder %s97, %s113
      %p115 = scmp.eq.s32.totalorder %s21, 0
      %p116 = por %p114, %p115
      %s117 = ssub.s32 %s15, %s22
      %p118 = scmp.eq.s32.totalorder %s117, 0
      %s120 = sadd.s32 %s119, 1
      %s121 = scalar_select %p118, %s119, %s120
      %p124 = pneg %p118
      %p125 = scmp.eq.s32.totalorder %s15, 2
      %p126 = por %p124, %p125
      %p127 = scmp.ne.s32.totalorder %s119, %s122
      %p128 = scmp.eq.s32.totalorder %s15, 0
      %p129 = por %p127, %p128
      %p130 = scmp.ne.s32.totalorder %s119, %s122
      %p131 = scmp.eq.s32.totalorder %s20, 2
      %p132 = por %p130, %p131
      %p133 = scmp.ne.s32.totalorder %s122, %s123
      %p134 = scmp.eq.s32.totalorder %s20, 0
      %p135 = por %p133, %p134
      %p136 = scmp.ne.s32.totalorder %s122, %s123
      %p137 = scmp.eq.s32.totalorder %s21, 2
      %p138 = por %p136, %p137
      %p140 = scmp.ne.s32.totalorder %s123, %s139
      %p141 = scmp.eq.s32.totalorder %s21, 0
      %p142 = por %p140, %p141
      %s143 = ssub.s32 %s15, %s22
      %p144 = scmp.eq.s32.totalorder %s143, 0
      %s146 = sadd.s32 %s145, 1
      %s147 = scalar_select %p144, %s145, %s146
      %p150 = pneg %p144
      %p151 = scmp.eq.s32.totalorder %s15, 2
      %p152 = por %p150, %p151
      %p153 = scmp.ne.s32.totalorder %s145, %s148
      %p154 = scmp.eq.s32.totalorder %s15, 0
      %p155 = por %p153, %p154
      %p156 = scmp.ne.s32.totalorder %s145, %s148
      %p157 = scmp.eq.s32.totalorder %s20, 2
      %p158 = por %p156, %p157
      %p159 = scmp.ne.s32.totalorder %s148, %s149
      %p160 = scmp.eq.s32.totalorder %s20, 0
      %p161 = por %p159, %p160
      %p162 = scmp.ne.s32.totalorder %s148, %s149
      %p163 = scmp.eq.s32.totalorder %s21, 2
      %p164 = por %p162, %p163
      %p166 = scmp.ne.s32.totalorder %s149, %s165
      %p167 = scmp.eq.s32.totalorder %s21, 0
      %p168 = por %p166, %p167
      %p169 = scmp.le.s32.totalorder 1, %s15
      %p170 = scmp.lt.s32.totalorder %s15, 4
      %p171 = pnand %p169, %p170
      %p172 = pneg %p171
      // Predicated region
      $region9: #{tpu_custom_call.1} parent=5 // pred_check
        _
      $region10: #{tpu_custom_call.1} parent=5 // pred_check_branch
        %174 = sbr.rel (%p171) target = $region12
      $region11: #{tpu_custom_call.1} parent=5 // pred_region
        %s175 = ssub.s32 %s15, 1
        // Predicated region
        $region13: #{tpu_custom_call.1} parent=11 // pred_check
          %p176 = pneg %p62
        $region14: #{tpu_custom_call.1} parent=11 // pred_check_branch
          %178 = sbr.rel (%p176) target = $region16
        $region15: #{tpu_custom_call.1} parent=11 // pred_region
          _
        $region16: #{tpu_custom_call.1} parent=11 // pred_fallthru
          _
        // Predicated region
        $region17: #{tpu_custom_call.1} parent=11 // pred_check
          %p179 = pneg %p83
        $region18: #{tpu_custom_call.1} parent=11 // pred_check_branch
          %181 = sbr.rel (%p179) target = $region20
        $region19: #{tpu_custom_call.1} parent=11 // pred_region
          _
        $region20: #{tpu_custom_call.1} parent=11 // pred_fallthru
          _
      $region12: #{tpu_custom_call.1} parent=5 // pred_fallthru
        _
      %p182 = scmp.lt.s32.totalorder %s15, 3
      // Predicated region
      $region21: #{tpu_custom_call.1} parent=5 // pred_check
        %p183 = pneg %p182
      $region22: #{tpu_custom_call.1} parent=5 // pred_check_branch
        %185 = sbr.rel (%p183) target = $region24
      $region23: #{tpu_custom_call.1} parent=5 // pred_region
        // Predicated region
        $region25: #{tpu_custom_call.1} parent=23 // pred_check
          %p186 = pneg %p35
        $region26: #{tpu_custom_call.1} parent=23 // pred_check_branch
          %188 = sbr.rel (%p186) target = $region28
        $region27: #{tpu_custom_call.1} parent=23 // pred_region
          %s189 = smul.u32 16, %s15
          %p190 = scmp.lt.s32.totalorder %s189, 47
          %s191 = scalar_select %p190, %s189, 47
          %s192 = smul.addr %s191, 4
          %s193 = scalar_lea.vmem %s0, %s192
          %s194 = smul.u32 16, %s15
        $region28: #{tpu_custom_call.1} parent=23 // pred_fallthru
          _
      $region24: #{tpu_custom_call.1} parent=5 // pred_fallthru
        _
      %p195 = scmp.le.s32.totalorder 1, %s15
      %p196 = scmp.lt.s32.totalorder %s15, 4
      %p197 = pnand %p195, %p196
      %p198 = pneg %p197
      // Predicated region
      $region29: #{tpu_custom_call.1} parent=5 // pred_check
        _
      $region30: #{tpu_custom_call.1} parent=5 // pred_check_branch
        %200 = sbr.rel (%p197) target = $region32
      $region31: #{tpu_custom_call.1} parent=5 // pred_region
        %s201 = ssub.s32 %s15, 1
        %s202 = smul.u32 16, %s20
        %p203 = scmp.lt.s32.totalorder %s202, 47
        %s204 = scalar_select %p203, %s202, 47
        %s205 = smul.addr %s204, 4
        %s206 = scalar_lea.vmem %s0, %s205
        %p207 = pneg %p41
        %p208 = pneg %p38
        %p209 = pneg %p62
        %p210 = pneg %p59
        %p211 = pneg %p83
        %p212 = pneg %p80
        %p213 = pneg %p109
        %p214 = pneg %p106
        %s215 = smul.u32 16, %s20
        %p216 = scmp.lt.s32.totalorder %s215, 47
        %s217 = scalar_select %p216, %s215, 47
        %s218 = smul.addr %s217, 4
        %s219 = scalar_lea.vmem %s3, %s218
        %p220 = pneg %p135
        %p221 = pneg %p132
        %s222 = smul.u32 16, %s20
        %p223 = scmp.lt.s32.totalorder %s222, 47
        %s224 = scalar_select %p223, %s222, 47
        %s225 = smul.addr %s224, 8
        %s226 = scalar_lea.vmem %s4, %s225
        %p227 = pneg %p161
        %p228 = pneg %p158
        %s229 = sand.u32 %s148, 1
        %s230 = scalar_lea.sflag [#allocation3], %s229
        %s231 = sand.u32 %s148, 1
        %s232 = smul.addr %s231, 4
        %s233 = scalar_lea.vmem [#allocation2], %s232
        %s234 = smul.u32 16, %s20
        %p235 = scmp.lt.s32.totalorder %s234, 47
        %s236 = scalar_select %p235, %s234, 47
        %s237 = smul.addr %s236, 4
        %s238 = scalar_lea.vmem %s0, %s237
        %s239 = smul.u32 16, %s20
        %s240 = smul.u32 16, %s20
        %p241 = scmp.lt.s32.totalorder %s240, 47
        %s242 = scalar_select %p241, %s240, 47
        %s243 = smul.addr %s242, 4
        %s244 = scalar_lea.vmem %s3, %s243
        %s245 = smul.u32 16, %s20
        %s246 = smul.u32 16, %s20
        %p247 = scmp.lt.s32.totalorder %s246, 47
        %s248 = scalar_select %p247, %s246, 47
        %s249 = smul.addr %s248, 8
        %s250 = scalar_lea.vmem %s4, %s249
        %s251 = smul.u32 16, %s20
        %v253 = vld [vmem:[%s238] sm:$0xf]
        %v254 = vld [vmem:[%s238 + $0x4] sm:$0xf]
        %v255 = vld [vmem:[%s238 + $0x8] sm:$0xf]
        %v256 = vld [vmem:[%s238 + $0xc] sm:$0xf]
        %v257 = vld [vmem:[%s238 + $0x10] sm:$0xf]
        %v258 = vld [vmem:[%s238 + $0x14] sm:$0xf]
        %v259 = vld [vmem:[%s238 + $0x18] sm:$0xf]
        %v260 = vld [vmem:[%s238 + $0x1c] sm:$0xf]
        %v261 = vld [vmem:[%s238 + $0x20] sm:$0xf]
        %v262 = vld [vmem:[%s238 + $0x24] sm:$0xf]
        %v263 = vld [vmem:[%s238 + $0x28] sm:$0xf]
        %v264 = vld [vmem:[%s238 + $0x2c] sm:$0xf]
        %v265 = vld [vmem:[%s238 + $0x30] sm:$0xf]
        %v266 = vld [vmem:[%s238 + $0x34] sm:$0xf]
        %v267 = vld [vmem:[%s238 + $0x38] sm:$0xf]
        %v268 = vld [vmem:[%s238 + $0x3c] sm:$0xf]
        %v269 = vld [vmem:[%s1] sm:$0xf]
        %v270 = vld [vmem:[%s1 + $0x4] sm:$0xf]
        %v287 = vunpack.c.l.b16 %v253
        %v288 = vunpack.c.l.b16 %v254
        %v289 = vunpack.c.l.b16 %v255
        %v290 = vunpack.c.l.b16 %v256
        %v291 = vunpack.c.l.b16 %v257
        %v292 = vunpack.c.l.b16 %v258
        %v293 = vunpack.c.l.b16 %v259
        %v294 = vunpack.c.l.b16 %v260
        %v295 = vunpack.c.l.b16 %v261
        %v296 = vunpack.c.l.b16 %v262
        %v297 = vunpack.c.l.b16 %v263
        %v298 = vunpack.c.l.b16 %v264
        %v299 = vunpack.c.l.b16 %v265
        %v300 = vunpack.c.l.b16 %v266
        %v301 = vunpack.c.l.b16 %v267
        %v302 = vunpack.c.l.b16 %v268
        %v303 = vpack.c.b16 %v288, %v287
        %v304 = vpack.c.b16 %v290, %v289
        %v305 = vpack.c.b16 %v292, %v291
        %v306 = vpack.c.b16 %v294, %v293
        %v307 = vpack.c.b16 %v296, %v295
        %v308 = vpack.c.b16 %v298, %v297
        %v309 = vpack.c.b16 %v300, %v299
        %v310 = vpack.c.b16 %v302, %v301
        %v313 = vunpack.c.l.b16 %v269
        %v314 = vunpack.c.l.b16 %v270
        %v315 = vpack.c.b16 %v314, %v313
        %vm317 = vcmask 130048
        %v319 = vsel %vm317, %v303, 0
        %v322 = vsel %vm317, %v304, 0
        %v325 = vsel %vm317, %v305, 0
        %v328 = vsel %vm317, %v306, 0
        %v331 = vsel %vm317, %v307, 0
        %v334 = vsel %vm317, %v308, 0
        %v337 = vsel %vm317, %v309, 0
        %v340 = vsel %vm317, %v310, 0
        %342 = vmatpush.bf16.msra.mxu0 0
        %343 = vmatpush.bf16.msra.mxu0 0
        %344 = vmatpush.bf16.msra.mxu0 0
        %345 = vmatpush.bf16.msra.mxu0 0
        %346 = vmatpush.bf16.msra.mxu0 0
        %347 = vmatpush.bf16.msra.mxu0 0
        %348 = vmatpush.bf16.msra.mxu0 0
        %349 = vmatpush.bf16.msra.mxu0 %v315
        %350 = vmatmul.bf16.gmra.mxu0 %v319
        %v351 = vpop.f32.mrf.mxu0
        %v352 = vadd.f32 0.0, %v351
        %v353 = vpop.f32.mrf.mxu0
        %v354 = vadd.f32 0.0, %v353
        %355 = vmatmul.bf16.gmra.mxu0 %v322
        %v356 = vpop.f32.mrf.mxu0
        %v357 = vadd.f32 0.0, %v356
        %v358 = vpop.f32.mrf.mxu0
        %v359 = vadd.f32 0.0, %v358
        %360 = vmatmul.bf16.gmra.mxu0 %v325
        %v361 = vpop.f32.mrf.mxu0
        %v362 = vadd.f32 0.0, %v361
        %v363 = vpop.f32.mrf.mxu0
        %v364 = vadd.f32 0.0, %v363
        %365 = vmatmul.bf16.gmra.mxu0 %v328
        %v366 = vpop.f32.mrf.mxu0
        %v367 = vadd.f32 0.0, %v366
        %v368 = vpop.f32.mrf.mxu0
        %v369 = vadd.f32 0.0, %v368
        %370 = vmatmul.bf16.gmra.mxu0 %v331
        %v371 = vpop.f32.mrf.mxu0
        %v372 = vadd.f32 0.0, %v371
        %v373 = vpop.f32.mrf.mxu0
        %v374 = vadd.f32 0.0, %v373
        %375 = vmatmul.bf16.gmra.mxu0 %v334
        %v376 = vpop.f32.mrf.mxu0
        %v377 = vadd.f32 0.0, %v376
        %v378 = vpop.f32.mrf.mxu0
        %v379 = vadd.f32 0.0, %v378
        %380 = vmatmul.bf16.gmra.mxu0 %v337
        %v381 = vpop.f32.mrf.mxu0
        %v382 = vadd.f32 0.0, %v381
        %v383 = vpop.f32.mrf.mxu0
        %v384 = vadd.f32 0.0, %v383
        %385 = vmatmul.bf16.gmra.mxu0 %v340
        %v386 = vpop.f32.mrf.mxu0
        %v387 = vadd.f32 0.0, %v386
        %v388 = vpop.f32.mrf.mxu0
        %v389 = vadd.f32 0.0, %v388
        %390 = vdwg.mxu0
        %v391 = vld [vmem:[%s2] sm:$0xff]
        %v392 = vld [vmem:[%s2 + $0x8] sm:$0xff]
        %v393 = vld [vmem:[%s2 + $0x10] sm:$0xff]
        %v394 = vld [vmem:[%s2 + $0x18] sm:$0xff]
        %vm395 = vcmask 261120
        %v397 = vsel %vm395, %v352, 0
        %v400 = vsel %vm395, %v354, 0
        %v403 = vsel %vm395, %v357, 0
        %v406 = vsel %vm395, %v359, 0
        %v409 = vsel %vm395, %v362, 0
        %v412 = vsel %vm395, %v364, 0
        %v415 = vsel %vm395, %v367, 0
        %v418 = vsel %vm395, %v369, 0
        %v421 = vsel %vm395, %v372, 0
        %v424 = vsel %vm395, %v374, 0
        %v427 = vsel %vm395, %v377, 0
        %v430 = vsel %vm395, %v379, 0
        %v433 = vsel %vm395, %v382, 0
        %v436 = vsel %vm395, %v384, 0
        %v439 = vsel %vm395, %v387, 0
        %v442 = vsel %vm395, %v389, 0
        %444 = vmatpush.msra.mxu0 0.0
        %445 = vmatpush.msra.mxu0 0.0
        %446 = vmatpush.msra.mxu0 0.0
        %447 = vmatpush.msra.mxu0 0.0
        %448 = vmatpush.msra.mxu0 0.0
        %449 = vmatpush.msra.mxu0 0.0
        %450 = vmatpush.msra.mxu0 0.0
        %451 = vmatpush.msra.mxu0 0.0
        %452 = vmatpush.msra.mxu0 0.0
        %453 = vmatpush.msra.mxu0 0.0
        %454 = vmatpush.msra.mxu0 0.0
        %455 = vmatpush.msra.mxu0 0.0
        %456 = vmatpush.msra.mxu0 %v394
        %457 = vmatpush.msra.mxu0 %v393
        %458 = vmatpush.msra.mxu0 %v392
        %459 = vmatpush.msra.mxu0 %v391
        %460 = vmatmul.f32.gmra.mxu0 %v397
        %v461 = vpop.f32.mrf.mxu0
        %v462 = vadd.f32 0.0, %v461
        %463 = vmatmul.f32.gmra.mxu0 %v400
        %v464 = vpop.f32.mrf.mxu0
        %v465 = vadd.f32 0.0, %v464
        %466 = vmatmul.f32.gmra.mxu0 %v403
        %v467 = vpop.f32.mrf.mxu0
        %v468 = vadd.f32 0.0, %v467
        %469 = vmatmul.f32.gmra.mxu0 %v406
        %v470 = vpop.f32.mrf.mxu0
        %v471 = vadd.f32 0.0, %v470
        %472 = vmatmul.f32.gmra.mxu0 %v409
        %v473 = vpop.f32.mrf.mxu0
        %v474 = vadd.f32 0.0, %v473
        %475 = vmatmul.f32.gmra.mxu0 %v412
        %v476 = vpop.f32.mrf.mxu0
        %v477 = vadd.f32 0.0, %v476
        %478 = vmatmul.f32.gmra.mxu0 %v415
        %v479 = vpop.f32.mrf.mxu0
        %v480 = vadd.f32 0.0, %v479
        %481 = vmatmul.f32.gmra.mxu0 %v418
        %v482 = vpop.f32.mrf.mxu0
        %v483 = vadd.f32 0.0, %v482
        %484 = vmatmul.f32.gmra.mxu0 %v421
        %v485 = vpop.f32.mrf.mxu0
        %v486 = vadd.f32 0.0, %v485
        %487 = vmatmul.f32.gmra.mxu0 %v424
        %v488 = vpop.f32.mrf.mxu0
        %v489 = vadd.f32 0.0, %v488
        %490 = vmatmul.f32.gmra.mxu0 %v427
        %v491 = vpop.f32.mrf.mxu0
        %v492 = vadd.f32 0.0, %v491
        %493 = vmatmul.f32.gmra.mxu0 %v430
        %v494 = vpop.f32.mrf.mxu0
        %v495 = vadd.f32 0.0, %v494
        %496 = vmatmul.f32.gmra.mxu0 %v433
        %v497 = vpop.f32.mrf.mxu0
        %v498 = vadd.f32 0.0, %v497
        %499 = vmatmul.f32.gmra.mxu0 %v436
        %v500 = vpop.f32.mrf.mxu0
        %v501 = vadd.f32 0.0, %v500
        %502 = vmatmul.f32.gmra.mxu0 %v439
        %v503 = vpop.f32.mrf.mxu0
        %v504 = vadd.f32 0.0, %v503
        %505 = vmatmul.f32.gmra.mxu0 %v442
        %v506 = vpop.f32.mrf.mxu0
        %v507 = vadd.f32 0.0, %v506
        %508 = vdwg.mxu0
        %v509 = vpack.c.bf16 %v352, %v352
        %v510 = vpack.c.bf16 %v354, %v354
        %v511 = vpack.c.bf16 %v357, %v357
        %v512 = vpack.c.bf16 %v359, %v359
        %v513 = vpack.c.bf16 %v362, %v362
        %v514 = vpack.c.bf16 %v364, %v364
        %v515 = vpack.c.bf16 %v367, %v367
        %v516 = vpack.c.bf16 %v369, %v369
        %v517 = vpack.c.bf16 %v372, %v372
        %v518 = vpack.c.bf16 %v374, %v374
        %v519 = vpack.c.bf16 %v377, %v377
        %v520 = vpack.c.bf16 %v379, %v379
        %v521 = vpack.c.bf16 %v382, %v382
        %v522 = vpack.c.bf16 %v384, %v384
        %v523 = vpack.c.bf16 %v387, %v387
        %v524 = vpack.c.bf16 %v389, %v389
        %vm525 = vcmask 257024
        %526 = vst.msk [vmem:[%s244] sm:$0xf] %vm525, %v509
        %527 = vst.msk [vmem:[%s244 + $0x4] sm:$0xf] %vm525, %v510
        %528 = vst.msk [vmem:[%s244 + $0x8] sm:$0xf] %vm525, %v511
        %529 = vst.msk [vmem:[%s244 + $0xc] sm:$0xf] %vm525, %v512
        %530 = vst.msk [vmem:[%s244 + $0x10] sm:$0xf] %vm525, %v513
        %531 = vst.msk [vmem:[%s244 + $0x14] sm:$0xf] %vm525, %v514
        %532 = vst.msk [vmem:[%s244 + $0x18] sm:$0xf] %vm525, %v515
        %533 = vst.msk [vmem:[%s244 + $0x1c] sm:$0xf] %vm525, %v516
        %534 = vst.msk [vmem:[%s244 + $0x20] sm:$0xf] %vm525, %v517
        %535 = vst.msk [vmem:[%s244 + $0x24] sm:$0xf] %vm525, %v518
        %536 = vst.msk [vmem:[%s244 + $0x28] sm:$0xf] %vm525, %v519
        %537 = vst.msk [vmem:[%s244 + $0x2c] sm:$0xf] %vm525, %v520
        %538 = vst.msk [vmem:[%s244 + $0x30] sm:$0xf] %vm525, %v521
        %539 = vst.msk [vmem:[%s244 + $0x34] sm:$0xf] %vm525, %v522
        %540 = vst.msk [vmem:[%s244 + $0x38] sm:$0xf] %vm525, %v523
        %541 = vst.msk [vmem:[%s244 + $0x3c] sm:$0xf] %vm525, %v524
        %vm542 = vcmask 31744
        %543 = vst.msk [vmem:[%s250] sm:$0xff] %vm542, %v462
        %544 = vst.msk [vmem:[%s250 + $0x8] sm:$0xff] %vm542, %v465
        %545 = vst.msk [vmem:[%s250 + $0x10] sm:$0xff] %vm542, %v468
        %546 = vst.msk [vmem:[%s250 + $0x18] sm:$0xff] %vm542, %v471
        %547 = vst.msk [vmem:[%s250 + $0x20] sm:$0xff] %vm542, %v474
        %548 = vst.msk [vmem:[%s250 + $0x28] sm:$0xff] %vm542, %v477
        %549 = vst.msk [vmem:[%s250 + $0x30] sm:$0xff] %vm542, %v480
        %550 = vst.msk [vmem:[%s250 + $0x38] sm:$0xff] %vm542, %v483
        %551 = vst.msk [vmem:[%s250 + $0x40] sm:$0xff] %vm542, %v486
        %552 = vst.msk [vmem:[%s250 + $0x48] sm:$0xff] %vm542, %v489
        %553 = vst.msk [vmem:[%s250 + $0x50] sm:$0xff] %vm542, %v492
        %554 = vst.msk [vmem:[%s250 + $0x58] sm:$0xff] %vm542, %v495
        %555 = vst.msk [vmem:[%s250 + $0x60] sm:$0xff] %vm542, %v498
        %556 = vst.msk [vmem:[%s250 + $0x68] sm:$0xff] %vm542, %v501
        %557 = vst.msk [vmem:[%s250 + $0x70] sm:$0xff] %vm542, %v504
        %558 = vst.msk [vmem:[%s250 + $0x78] sm:$0xff] %vm542, %v507
        %575 = vrot.lane.b32.xlu0 %v462, 124
        %v576 = vpop.permute.xlu0 %575
        %577 = vrot.lane.b32.xlu0 %v465, 124
        %v578 = vpop.permute.xlu0 %577
        %579 = vrot.lane.b32.xlu0 %v468, 124
        %v580 = vpop.permute.xlu0 %579
        %581 = vrot.lane.b32.xlu0 %v471, 124
        %v582 = vpop.permute.xlu0 %581
        %583 = vrot.lane.b32.xlu0 %v474, 124
        %v584 = vpop.permute.xlu0 %583
        %585 = vrot.lane.b32.xlu0 %v477, 124
        %v586 = vpop.permute.xlu0 %585
        %587 = vrot.lane.b32.xlu0 %v480, 124
        %v588 = vpop.permute.xlu0 %587
        %589 = vrot.lane.b32.xlu0 %v483, 124
        %v590 = vpop.permute.xlu0 %589
        %591 = vrot.lane.b32.xlu0 %v486, 124
        %v592 = vpop.permute.xlu0 %591
        %593 = vrot.lane.b32.xlu0 %v489, 124
        %v594 = vpop.permute.xlu0 %593
        %595 = vrot.lane.b32.xlu0 %v492, 124
        %v596 = vpop.permute.xlu0 %595
        %597 = vrot.lane.b32.xlu0 %v495, 124
        %v598 = vpop.permute.xlu0 %597
        %599 = vrot.lane.b32.xlu0 %v498, 124
        %v600 = vpop.permute.xlu0 %599
        %601 = vrot.lane.b32.xlu0 %v501, 124
        %v602 = vpop.permute.xlu0 %601
        %603 = vrot.lane.b32.xlu0 %v504, 124
        %v604 = vpop.permute.xlu0 %603
        %605 = vrot.lane.b32.xlu0 %v507, 124
        %v606 = vpop.permute.xlu0 %605
        %623 = vxpose.xlu0.b32.start [1/16] %v576, 128
        %624 = vxpose.xlu0.b32.cont [2/16] %v578, 128
        %625 = vxpose.xlu0.b32.cont [3/16] %v580, 128
        %626 = vxpose.xlu0.b32.cont [4/16] %v582, 128
        %627 = vxpose.xlu0.b32.cont [5/16] %v584, 128
        %628 = vxpose.xlu0.b32.cont [6/16] %v586, 128
        %629 = vxpose.xlu0.b32.cont [7/16] %v588, 128
        %630 = vxpose.xlu0.b32.cont [8/16] %v590, 128
        %631 = vxpose.xlu0.b32.cont [9/16] %v592, 128
        %632 = vxpose.xlu0.b32.cont [10/16] %v594, 128
        %633 = vxpose.xlu0.b32.cont [11/16] %v596, 128
        %634 = vxpose.xlu0.b32.cont [12/16] %v598, 128
        %635 = vxpose.xlu0.b32.cont [13/16] %v600, 128
        %636 = vxpose.xlu0.b32.cont [14/16] %v602, 128
        %637 = vxpose.xlu0.b32.cont [15/16] %v604, 128
        %638 = vxpose.xlu0.b32.end [16/16] %v606, 128
        %v639 = vpop.trf.xlu0
        %v640 = vpop.trf.xlu0
        %v641 = vpop.trf.xlu0
        %v642 = vpop.trf.xlu0
        %v643 = vpop.trf.xlu0
        %v644 = vpop.trf.xlu0
        %v645 = vpop.trf.xlu0
        %v646 = vpop.trf.xlu0
        %v647 = vpop.trf.xlu0
        %v648 = vpop.trf.xlu0
        %v649 = vpop.trf.xlu0
        %v650 = vpop.trf.xlu0
        %v651 = vpop.trf.xlu0
        %v652 = vpop.trf.xlu0
        %v653 = vpop.trf.xlu0
        %v654 = vpop.trf.xlu0
        %655 = vst [vmem:[%s233] sm:$0xf] %v639
        %s656 = smul.u32 16, %s20
        %p657 = scmp.lt.s32.totalorder %s656, 47
        %s658 = scalar_select %p657, %s656, 47
        %s659 = smul.addr %s658, 4
        %s660 = scalar_lea.vmem %s3, %s659
        %s661 = smul.u32 16, %s20
        %p662 = scmp.lt.s32.totalorder %s661, 47
        %s663 = scalar_select %p662, %s661, 47
        %s664 = smul.addr %s663, 8
        %s665 = scalar_lea.vmem %s4, %s664
        %s666 = sand.u32 %s148, 1
        %s667 = scalar_lea.sflag [#allocation3], %s666
        %s668 = sand.u32 %s148, 1
        %s669 = smul.addr %s668, 4
        %s670 = scalar_lea.vmem [#allocation2], %s669
        // Predicated region
        $region33: #{tpu_custom_call.1} parent=31 // pred_check
          %p671 = pneg %p106
        $region34: #{tpu_custom_call.1} parent=31 // pred_check_branch
          %673 = sbr.rel (%p671) target = $region36
        $region35: #{tpu_custom_call.1} parent=31 // pred_region
          %s674 = smul.u32 16, %s20
        $region36: #{tpu_custom_call.1} parent=31 // pred_fallthru
          _
        // Predicated region
        $region37: #{tpu_custom_call.1} parent=31 // pred_check
          %p675 = pneg %p132
        $region38: #{tpu_custom_call.1} parent=31 // pred_check_branch
          %677 = sbr.rel (%p675) target = $region40
        $region39: #{tpu_custom_call.1} parent=31 // pred_region
          %s678 = smul.u32 16, %s20
        $region40: #{tpu_custom_call.1} parent=31 // pred_fallthru
          _
        // Predicated region
        $region41: #{tpu_custom_call.1} parent=31 // pred_check
          %p679 = pneg %p158
        $region42: #{tpu_custom_call.1} parent=31 // pred_check_branch
          %681 = sbr.rel (%p679) target = $region44
        $region43: #{tpu_custom_call.1} parent=31 // pred_region
          %683 = vsyncadd %s667, 0
          %s684 = smul.addr %s20, 4
          %s685 = scalar_lea.hbm %s5, %s684
          %s687 = sshll.u32 %s670, 4
          %s688 = int_to_ptr.vmem [resolvable:$true] %s687
          %s689 = sshll.u32 %s685, 4
          %s690 = int_to_ptr.hbm [resolvable:$true] %s689
          %692 = dma.vmem_to_hbm [thread:$0]  %s688, 64, %s690, %s667
        $region44: #{tpu_custom_call.1} parent=31 // pred_fallthru
          _
      $region32: #{tpu_custom_call.1} parent=5 // pred_fallthru
        _
      %p693 = scmp.le.s32.totalorder 2, %s15
      // Predicated region
      $region45: #{tpu_custom_call.1} parent=5 // pred_check
        %p694 = pneg %p693
      $region46: #{tpu_custom_call.1} parent=5 // pred_check_branch
        %696 = sbr.rel (%p694) target = $region48
      $region47: #{tpu_custom_call.1} parent=5 // pred_region
        %s697 = ssub.s32 %s15, 2
        // Predicated region
        $region49: #{tpu_custom_call.1} parent=47 // pred_check
          %p698 = pneg %p112
        $region50: #{tpu_custom_call.1} parent=47 // pred_check_branch
          %700 = sbr.rel (%p698) target = $region52
        $region51: #{tpu_custom_call.1} parent=47 // pred_region
          %s701 = smul.u32 16, %s21
          %p702 = scmp.lt.s32.totalorder %s701, 47
          %s703 = scalar_select %p702, %s701, 47
          %s704 = smul.addr %s703, 4
          %s705 = scalar_lea.vmem %s3, %s704
        $region52: #{tpu_custom_call.1} parent=47 // pred_fallthru
          _
        // Predicated region
        $region53: #{tpu_custom_call.1} parent=47 // pred_check
          %p706 = pneg %p138
        $region54: #{tpu_custom_call.1} parent=47 // pred_check_branch
          %708 = sbr.rel (%p706) target = $region56
        $region55: #{tpu_custom_call.1} parent=47 // pred_region
          %s709 = smul.u32 16, %s21
          %p710 = scmp.lt.s32.totalorder %s709, 47
          %s711 = scalar_select %p710, %s709, 47
          %s712 = smul.addr %s711, 8
          %s713 = scalar_lea.vmem %s4, %s712
        $region56: #{tpu_custom_call.1} parent=47 // pred_fallthru
          _
        // Predicated region
        $region57: #{tpu_custom_call.1} parent=47 // pred_check
          %p714 = pneg %p164
        $region58: #{tpu_custom_call.1} parent=47 // pred_check_branch
          %716 = sbr.rel (%p714) target = $region60
        $region59: #{tpu_custom_call.1} parent=47 // pred_region
          %s717 = sand.u32 %s149, 1
          %s718 = scalar_lea.sflag [#allocation3], %s717
          %s719 = sand.u32 %s149, 1
          %s720 = smul.addr %s719, 4
          %s721 = scalar_lea.vmem [#allocation2], %s720
          %723 = dma.done %s718, 64
        $region60: #{tpu_custom_call.1} parent=47 // pred_fallthru
          _
      $region48: #{tpu_custom_call.1} parent=5 // pred_fallthru
        _
    $region6: #{tpu_custom_call.1} parent=1 // loop_footer
      %s19 = sadd.s32 1, %s15
    $region7: #{tpu_custom_call.1} parent=1 // loop_footer_branch
      %14 = sbr.rel target = $region3
    $region8: #{tpu_custom_call.1} parent=1 // loop_exit
      _
    %724 = vsyncpa [#allocation3], 1
    %s725 = scalar_lea.sflag [#allocation3], 1
    %726 = vsyncpa %s725, 1

</llo_original>
